<compile_context>
chip_gen: v6e
topology: v6e:2x2x1
jax: 0.10.0
libtpu: 0.0.40
codegen_flags: <defaults>
</compile_context>

<pallas_src>
import jax
import jax.numpy as jnp
import numpy as np
from jax import lax
from jax.experimental import pallas as pl
from jax.experimental.pallas import tpu as pltpu


def attention_kernel(inp_ref, enc_ref, bias_ref, w_in_t_ref, w_out_c_t_ref,
                     w_out_i_t_ref, out_ref, attn_ref):
    Bb, T, S = attn_ref.shape
    D_src = enc_ref.shape[-1]
    cdt = inp_ref.dtype

    inp2d = inp_ref[...]                       # (Bb*T, D_in)  compute dtype
    enc = enc_ref[...]                         # (Bb, S, D_src) compute dtype
    bias = bias_ref[...]                       # (Bb, 1, S)     f32 additive mask

    # x = input_proj(inputs): folded (Bb*T, D_in) @ (D_in, D_src) matmul on
    # the pre-transposed, grid-invariant weight.
    x = jnp.dot(inp2d, w_in_t_ref[...],
                preferred_element_type=jnp.float32)            # (Bb*T, D_src) f32
    x3 = x.reshape(Bb, T, D_src).astype(cdt)   # value-level; free for D_src>=128

    # attn_scores = bmm(x, encoder_outputs^T): batched contraction over the
    # minor dims of both operands (no explicit transpose of enc).
    scores = lax.dot_general(x3, enc, (((2,), (2,)), ((0,), (0,))),
                             preferred_element_type=jnp.float32)  # (Bb, T, S)

    # masked_fill_(mask, -inf) via additive bias. A fully padded source row
    # yields NaN after softmax, matching torch masked_fill(-inf)+softmax.
    scores = scores + bias

    # Softmax over the source dim, all in f32; exact divide so stored rows
    # sum to 1 (matches torch.softmax; review correctness note).
    m = jnp.max(scores, axis=-1, keepdims=True)
    p = jnp.exp(scores - m)
    attn = p / jnp.sum(p, axis=-1, keepdims=True)
    attn_ref[...] = attn

    # context = bmm(attn, encoder_outputs): batched, contract S against S.
    ctx = lax.dot_general(attn.astype(cdt), enc, (((2,), (1,)), ((0,), (0,))),
                          preferred_element_type=jnp.float32)     # (Bb, T, D_src)

    # out = tanh(output_proj(cat(ctx, inputs))): the concat + single matmul is
    # rewritten as two folded (Bb*T, D) matmuls on the split, pre-transposed
    # weight (mathematically identical, no in-kernel lane concat).  The store
    # is a direct 2-D write, no reshape.
    pre = (jnp.dot(ctx.reshape(Bb * T, D_src).astype(cdt), w_out_c_t_ref[...],
                   preferred_element_type=jnp.float32)
           + jnp.dot(inp2d, w_out_i_t_ref[...],
                     preferred_element_type=jnp.float32))
    out_ref[...] = jnp.tanh(pre)                                   # (Bb*T, D_out)


def _vmem_capacity_bytes():
    try:
        return int(pltpu.get_tpu_info().vmem_capacity_bytes)
    except Exception:
        return 64 << 20          # conservative fallback (v7x physical VMEM)


def _pick_batch_block(B, T, S, D_in, D_src, D_out, compute_itemsize,
                      budget_bytes):
    """Largest valid divisor of B whose per-step VMEM footprint fits budget."""
    # Blocked inputs / outputs are double-buffered by the pipeline (x2);
    # intermediates (x, scores/p/attn, ctx, pre + compute-dtype copies) are
    # single-buffered f32/compute values.
    in_blocks = compute_itemsize * (T * D_in + S * D_src) + 4 * S
    out_blocks = 4 * (T * D_out + T * S)
    interm = (4 * (2 * T * D_src + 3 * T * S + 2 * T * D_out)
              + compute_itemsize * (T * D_src + T * S))
    per_b = 2 * (in_blocks + out_blocks) + interm
    bb = max(1, min(B, budget_bytes // max(per_b, 1)))

    def ok(v):
        # must divide B; 2-D blocks want bb*T sublane-aligned unless full-size.
        return (B % v == 0) and ((v * T) % 8 == 0 or v == B)

    while bb > 1 and not ok(bb):
        bb -= 1
    if not ok(bb):
        bb = B

    # Keep at least two grid steps when possible so the "parallel" batch axis
    # can shard across v7x's two TensorCores (cheap on 1-TC chips).
    if B >= 2:
        cap = max(1, B // 2)
        while cap > 1 and not ok(cap):
            cap -= 1
        if ok(cap):
            bb = min(bb, cap)
    return bb


def attention_layer(inputs_tbd, encoder_outputs_sbd, encoder_padding_mask_sb,
                    w_in, w_out, *, compute_dtype=jnp.bfloat16):
    """Matches AttentionLayer.forward.

    Args:
      inputs_tbd:               (T, B, D_in)  float32
      encoder_outputs_sbd:      (S, B, D_src) float32
      encoder_padding_mask_sb:  (S, B)        bool (True = padded)
      w_in:  input_proj.weight  (D_src, D_in)
      w_out: output_proj.weight (D_out, D_in + D_src)
      compute_dtype: MXU operand dtype (bf16 default; accumulation and all
        elementwise math stay f32).
    Returns:
      (out (T, B, D_out) f32, attn_scores (B, T, S) f32)
    """
    T, B, D_in = inputs_tbd.shape
    S, _, D_src = encoder_outputs_sbd.shape
    D_out = w_out.shape[0]

    # Batch-major glue + HBM-side flattening (contiguous, free).
    inp = jnp.transpose(inputs_tbd, (1, 0, 2)).astype(compute_dtype)       # (B,T,Din)
    inp2d = inp.reshape(B * T, D_in)                                        # (B*T,Din)
    enc = jnp.transpose(encoder_outputs_sbd, (1, 0, 2)).astype(compute_dtype)  # (B,S,Dsrc)

    # Additive mask bias: 0 where valid, -inf where padded (replaces the int32
    # mask + in-kernel compare/select).
    bias = jnp.where(jnp.transpose(encoder_padding_mask_sb, (1, 0)),
                     -jnp.inf, 0.0).astype(jnp.float32).reshape(B, 1, S)

    # Pre-transpose weights once (grid-invariant).  torch cat order is
    # (context, inputs): the first D_src columns of w_out hit the context.
    w_in_t = jnp.asarray(w_in).T.astype(compute_dtype)                  # (Din, Dsrc)
    w_out_c_t = jnp.asarray(w_out[:, :D_src]).T.astype(compute_dtype)   # (Dsrc, Dout)
    w_out_i_t = jnp.asarray(w_out[:, D_src:]).T.astype(compute_dtype)   # (Din, Dout)

    vmem_cap = _vmem_capacity_bytes()
    vmem_limit = min(vmem_cap // 2, 64 << 20)     # respects v7x's 64 MiB VMEM
    bb = _pick_batch_block(B, T, S, D_in, D_src, D_out,
                           jnp.dtype(compute_dtype).itemsize,
                           budget_bytes=vmem_limit // 2)
    grid = (B // bb,)

    out2d, attn = pl.pallas_call(
        attention_kernel,
        out_shape=(jax.ShapeDtypeStruct((B * T, D_out), jnp.float32),
                   jax.ShapeDtypeStruct((B, T, S), jnp.float32)),
        grid_spec=pltpu.PrefetchScalarGridSpec(
            num_scalar_prefetch=0,
            grid=grid,
            in_specs=[
                pl.BlockSpec((bb * T, D_in), lambda b: (b, 0)),
                pl.BlockSpec((bb, S, D_src), lambda b: (b, 0, 0)),
                pl.BlockSpec((bb, 1, S), lambda b: (b, 0, 0)),
                pl.BlockSpec((D_in, D_src), lambda b: (0, 0)),
                pl.BlockSpec((D_src, D_out), lambda b: (0, 0)),
                pl.BlockSpec((D_in, D_out), lambda b: (0, 0)),
            ],
            out_specs=[
                pl.BlockSpec((bb * T, D_out), lambda b: (b, 0)),
                pl.BlockSpec((bb, T, S), lambda b: (b, 0, 0)),
            ],
        ),
        compiler_params=pltpu.CompilerParams(
            dimension_semantics=("parallel",),
            vmem_limit_bytes=vmem_limit),
    )(inp2d, enc, bias, w_in_t, w_out_c_t, w_out_i_t)

    out = out2d.reshape(B, T, D_out)
    return jnp.transpose(out, (1, 0, 2)), attn


def reference(inputs_tbd, encoder_outputs_sbd, mask_sb, w_in, w_out):
    """Pure-JAX f32 mirror of the PyTorch forward, for verification."""
    inp = jnp.transpose(inputs_tbd, (1, 0, 2))
    enc = jnp.transpose(encoder_outputs_sbd, (1, 0, 2))
    m = jnp.transpose(mask_sb, (1, 0))
    x = inp @ w_in.T
    scores = jnp.einsum('btd,bsd->bts', x, enc)
    scores = jnp.where(m[:, None, :], -jnp.inf, scores)
    attn = jax.nn.softmax(scores, axis=-1)
    ctx = jnp.einsum('bts,bsd->btd', attn, enc)
    cat = jnp.concatenate([ctx, inp], axis=-1)
    out = jnp.tanh(cat @ w_out.T)
    return jnp.transpose(out, (1, 0, 2)), attn


if __name__ == "__main__":
    # Small shapes implied by the forward: seq lens T/S, batch B, hidden dims.
    T, S, B = 8, 8, 2
    D_in, D_src, D_out = 32, 32, 32

    key = jax.random.PRNGKey(0)
    k1, k2, k3, k4 = jax.random.split(key, 4)

    inputs = jax.random.normal(k1, (T, B, D_in), dtype=jnp.float32)
    encoder_outputs = jax.random.normal(k2, (S, B, D_src), dtype=jnp.float32)
    # Pad out the last 3 source positions of batch 0, last 2 of batch 1.
    lengths = jnp.array([S - 3, S - 2], dtype=jnp.int32)                 # (B,)
    encoder_padding_mask = (jnp.arange(S)[:, None] >= lengths[None, :])  # (S,B) bool

    # Deterministic parameter init (nn.Linear weight shapes, bias=False).
    w_in = 0.1 * jax.random.normal(k3, (D_src, D_in), dtype=jnp.float32)
    w_out = 0.1 * jax.random.normal(k4, (D_out, D_in + D_src), dtype=jnp.float32)

    ref_out, ref_attn = reference(inputs, encoder_outputs,
                                  encoder_padding_mask, w_in, w_out)

    # f32 matmul-operand path: tight structural check against the mirror.
    out32, attn32 = attention_layer(inputs, encoder_outputs,
                                    encoder_padding_mask, w_in, w_out,
                                    compute_dtype=jnp.float32)
    jax.block_until_ready((out32, attn32))
    np.testing.assert_allclose(np.asarray(out32), np.asarray(ref_out),
                               rtol=5e-3, atol=5e-3)
    np.testing.assert_allclose(np.asarray(attn32), np.asarray(ref_attn),
                               rtol=5e-3, atol=5e-3)
    # Exact softmax: stored attention rows must sum to 1.
    np.testing.assert_allclose(np.asarray(attn32).sum(-1),
                               np.ones((B, T)), rtol=1e-5, atol=1e-5)

    # bf16 matmul-operand path (default performance configuration); looser
    # tolerance accounts for bf16 operand rounding, math is still f32-accum.
    out_bf, attn_bf = attention_layer(inputs, encoder_outputs,
                                      encoder_padding_mask, w_in, w_out)
    jax.block_until_ready((out_bf, attn_bf))
    np.testing.assert_allclose(np.asarray(out_bf), np.asarray(ref_out),
                               rtol=8e-2, atol=8e-2)
    np.testing.assert_allclose(np.asarray(attn_bf), np.asarray(ref_attn),
                               rtol=8e-2, atol=8e-2)

    print("KERNEL_OK")
</pallas_src>

<mosaic_0001>
module attributes {stable_mosaic.version = 11 : i64} {
  func.func @attention_kernel(%arg0: i32, %arg1: memref<8x32xf32, #tpu.memory_space<vmem>>, %arg2: memref<1x8x32xf32, #tpu.memory_space<vmem>>, %arg3: memref<1x1x8xf32, #tpu.memory_space<vmem>>, %arg4: memref<32x32xf32, #tpu.memory_space<vmem>>, %arg5: memref<32x32xf32, #tpu.memory_space<vmem>>, %arg6: memref<32x32xf32, #tpu.memory_space<vmem>>, %arg7: memref<8x32xf32, #tpu.memory_space<vmem>>, %arg8: memref<1x8x8xf32, #tpu.memory_space<vmem>>) attributes {dimension_semantics = [#tpu.dimension_semantics<parallel>], iteration_bounds = array<i64: 2>, scalar_prefetch = 0 : i64, scratch_operands = 0 : i64, tpu.core_type = #tpu.core_type<tc>, window_params = [{transform_indices = @transform_0, window_bounds = array<i64: 8, 32>}, {transform_indices = @transform_1, window_bounds = array<i64: 1, 8, 32>}, {transform_indices = @transform_2, window_bounds = array<i64: 1, 1, 8>}, {pipeline_mode = #tpu.pipeline_mode<synchronous>, transform_indices = @transform_3, window_bounds = array<i64: 32, 32>}, {pipeline_mode = #tpu.pipeline_mode<synchronous>, transform_indices = @transform_4, window_bounds = array<i64: 32, 32>}, {pipeline_mode = #tpu.pipeline_mode<synchronous>, transform_indices = @transform_5, window_bounds = array<i64: 32, 32>}, {transform_indices = @transform_6, window_bounds = array<i64: 8, 32>}, {transform_indices = @transform_7, window_bounds = array<i64: 1, 8, 8>}]} {
    %c0 = arith.constant 0 : index
    %c0_0 = arith.constant 0 : index
    %0 = vector.load %arg1[%c0, %c0_0] : memref<8x32xf32, #tpu.memory_space<vmem>>, vector<8x32xf32>
    %c0_1 = arith.constant 0 : index
    %c0_2 = arith.constant 0 : index
    %c0_3 = arith.constant 0 : index
    %1 = vector.load %arg2[%c0_1, %c0_2, %c0_3] : memref<1x8x32xf32, #tpu.memory_space<vmem>>, vector<1x8x32xf32>
    %c0_4 = arith.constant 0 : index
    %c0_5 = arith.constant 0 : index
    %c0_6 = arith.constant 0 : index
    %2 = vector.load %arg3[%c0_4, %c0_5, %c0_6] : memref<1x1x8xf32, #tpu.memory_space<vmem>>, vector<1x1x8xf32>
    %c0_7 = arith.constant 0 : index
    %c0_8 = arith.constant 0 : index
    %3 = vector.load %arg4[%c0_7, %c0_8] : memref<32x32xf32, #tpu.memory_space<vmem>>, vector<32x32xf32>
    %cst = arith.constant dense<0.000000e+00> : vector<8x32xf32>
    %4 = tpu.matmul %0, %3, %cst {dimension_numbers = #tpu.dot_dimension_numbers<[1], [0], [0], [1], [0, 0, 1, 1], [], []>} : vector<8x32xf32>, vector<32x32xf32>, vector<8x32xf32> -> vector<8x32xf32>
    %5 = vector.shape_cast %4 : vector<8x32xf32> to vector<1x8x32xf32>
    %cst_9 = arith.constant dense<0.000000e+00> : vector<1x8x8xf32>
    %6 = tpu.matmul %5, %1, %cst_9 {dimension_numbers = #tpu.dot_dimension_numbers<[2], [2], [1], [1], [0, 0, 0, 1, 1, 1], [0], [0]>} : vector<1x8x32xf32>, vector<1x8x32xf32>, vector<1x8x8xf32> -> vector<1x8x8xf32>
    %7 = vector.broadcast %2 : vector<1x1x8xf32> to vector<1x8x8xf32>
    %8 = arith.addf %6, %7 : vector<1x8x8xf32>
    %cst_10 = arith.constant dense<0xFF800000> : vector<1x8xf32>
    %9 = vector.multi_reduction <maximumf>, %8, %cst_10 [2] : vector<1x8x8xf32> to vector<1x8xf32>
    %10 = vector.shape_cast %9 : vector<1x8xf32> to vector<1x8x1xf32>
    %11 = vector.broadcast %10 : vector<1x8x1xf32> to vector<1x8x8xf32>
    %12 = arith.subf %8, %11 : vector<1x8x8xf32>
    %13 = math.exp %12 : vector<1x8x8xf32>
    %cst_11 = arith.constant dense<0.000000e+00> : vector<1x8xf32>
    %14 = vector.multi_reduction <add>, %13, %cst_11 [2] : vector<1x8x8xf32> to vector<1x8xf32>
    %15 = vector.shape_cast %14 : vector<1x8xf32> to vector<1x8x1xf32>
    %16 = vector.broadcast %15 : vector<1x8x1xf32> to vector<1x8x8xf32>
    %17 = arith.divf %13, %16 : vector<1x8x8xf32>
    %c0_12 = arith.constant 0 : index
    %c0_13 = arith.constant 0 : index
    %c0_14 = arith.constant 0 : index
    %18 = vector.load %arg8[%c0_12, %c0_13, %c0_14] : memref<1x8x8xf32, #tpu.memory_space<vmem>>, vector<1x8x8xf32>
    tpu.vector_store %arg8[%c0_12, %c0_13, %c0_14], %17 {strides = array<i32>} : memref<1x8x8xf32, #tpu.memory_space<vmem>>, vector<1x8x8xf32>,
    %cst_15 = arith.constant dense<0.000000e+00> : vector<1x8x32xf32>
    %19 = tpu.matmul %17, %1, %cst_15 {dimension_numbers = #tpu.dot_dimension_numbers<[2], [1], [1], [2], [0, 0, 0, 1, 1, 2], [0], [0]>} : vector<1x8x8xf32>, vector<1x8x32xf32>, vector<1x8x32xf32> -> vector<1x8x32xf32>
    %20 = vector.shape_cast %19 : vector<1x8x32xf32> to vector<8x32xf32>
    %c0_16 = arith.constant 0 : index
    %c0_17 = arith.constant 0 : index
    %21 = vector.load %arg5[%c0_16, %c0_17] : memref<32x32xf32, #tpu.memory_space<vmem>>, vector<32x32xf32>
    %cst_18 = arith.constant dense<0.000000e+00> : vector<8x32xf32>
    %22 = tpu.matmul %20, %21, %cst_18 {dimension_numbers = #tpu.dot_dimension_numbers<[1], [0], [0], [1], [0, 0, 1, 1], [], []>} : vector<8x32xf32>, vector<32x32xf32>, vector<8x32xf32> -> vector<8x32xf32>
    %c0_19 = arith.constant 0 : index
    %c0_20 = arith.constant 0 : index
    %23 = vector.load %arg6[%c0_19, %c0_20] : memref<32x32xf32, #tpu.memory_space<vmem>>, vector<32x32xf32>
    %cst_21 = arith.constant dense<0.000000e+00> : vector<8x32xf32>
    %24 = tpu.matmul %0, %23, %cst_21 {dimension_numbers = #tpu.dot_dimension_numbers<[1], [0], [0], [1], [0, 0, 1, 1], [], []>} : vector<8x32xf32>, vector<32x32xf32>, vector<8x32xf32> -> vector<8x32xf32>
    %25 = arith.addf %22, %24 : vector<8x32xf32>
    %26 = math.tanh %25 : vector<8x32xf32>
    %c0_22 = arith.constant 0 : index
    %c0_23 = arith.constant 0 : index
    %27 = vector.load %arg7[%c0_22, %c0_23] : memref<8x32xf32, #tpu.memory_space<vmem>>, vector<8x32xf32>
    tpu.vector_store %arg7[%c0_22, %c0_23], %26 {strides = array<i32>} : memref<8x32xf32, #tpu.memory_space<vmem>>, vector<8x32xf32>,
    return
  }
  func.func @transform_0(%arg0: i32) -> (i32, i32) {
    %c0_i32 = arith.constant 0 : i32
    %c0_i32_0 = arith.constant 0 : i32
    return %arg0, %c0_i32 : i32, i32
  }
  func.func @transform_1(%arg0: i32) -> (i32, i32, i32) {
    %c0_i32 = arith.constant 0 : i32
    %c0_i32_0 = arith.constant 0 : i32
    %c0_i32_1 = arith.constant 0 : i32
    return %arg0, %c0_i32, %c0_i32_0 : i32, i32, i32
  }
  func.func @transform_2(%arg0: i32) -> (i32, i32, i32) {
    %c0_i32 = arith.constant 0 : i32
    %c0_i32_0 = arith.constant 0 : i32
    %c0_i32_1 = arith.constant 0 : i32
    return %arg0, %c0_i32, %c0_i32_0 : i32, i32, i32
  }
  func.func @transform_3(%arg0: i32) -> (i32, i32) {
    %c0_i32 = arith.constant 0 : i32
    %c0_i32_0 = arith.constant 0 : i32
    %c0_i32_1 = arith.constant 0 : i32
    return %c0_i32, %c0_i32_0 : i32, i32
  }
  func.func @transform_4(%arg0: i32) -> (i32, i32) {
    %c0_i32 = arith.constant 0 : i32
    %c0_i32_0 = arith.constant 0 : i32
    %c0_i32_1 = arith.constant 0 : i32
    return %c0_i32, %c0_i32_0 : i32, i32
  }
  func.func @transform_5(%arg0: i32) -> (i32, i32) {
    %c0_i32 = arith.constant 0 : i32
    %c0_i32_0 = arith.constant 0 : i32
    %c0_i32_1 = arith.constant 0 : i32
    return %c0_i32, %c0_i32_0 : i32, i32
  }
  func.func @transform_6(%arg0: i32) -> (i32, i32) {
    %c0_i32 = arith.constant 0 : i32
    %c0_i32_0 = arith.constant 0 : i32
    return %arg0, %c0_i32 : i32, i32
  }
  func.func @transform_7(%arg0: i32) -> (i32, i32, i32) {
    %c0_i32 = arith.constant 0 : i32
    %c0_i32_0 = arith.constant 0 : i32
    %c0_i32_1 = arith.constant 0 : i32
    return %arg0, %c0_i32, %c0_i32_0 : i32, i32, i32
  }
}

</mosaic_0001>

<llo_original>
// kernel: tpu_custom_call.1
$region0: #{tpu_custom_call.1}
  #allocation0 [shape = 'u32[]', space=smem, size = 0x4, offset = 0x4, fixed_abs, tag = 'smem constant byte address 0x4 - core index']
  #allocation1 [shape = 'u32[144,128]{1,0:T(1,128)}', space=vmem, size = 0x12000, scoped, tag = 'internal scratch']
  %s0 = inlined_call_operand.hbm [shape: f32[16,32], index: 0, kind: input, shape index: {}]
  %s1 = inlined_call_operand.hbm [shape: f32[2,8,32], index: 1, kind: input, shape index: {}]
  %s2 = inlined_call_operand.vmem [shape: f32[2,1,8], index: 2, kind: input, shape index: {}]
  %s3 = inlined_call_operand.hbm [shape: f32[32,32], index: 3, kind: input, shape index: {}]
  %s4 = inlined_call_operand.hbm [shape: f32[32,32], index: 4, kind: input, shape index: {}]
  %s5 = inlined_call_operand.hbm [shape: f32[32,32], index: 5, kind: input, shape index: {}]
  %s6 = inlined_call_operand.hbm [shape: f32[16,32], index: 6, kind: output, shape index: {0}]
  %s7 = inlined_call_operand.hbm [shape: f32[2,8,8], index: 7, kind: output, shape index: {1}]
  %8 = xla_tuple %s6, %s7
  %s9 = sld [smem:[#allocation0]]
  $region85: #{tpu_custom_call.1} parent=0
    _
  %s11 = ssub.s32 1, %s9
  %s12 = scalar_select 0, %s11, %s9
  $region1: #{tpu_custom_call.1} parent=0
    #allocation2 [shape = 'u8[8192]{0}', space=vmem, size = 0x2000, scoped, tag = 'input window, operand 0']
    #allocation3 [shape = 's32[2]{0}', space=sflag, size = 0x8, scoped, tag = 'scoped memory for tpu_custom_call.1']
    #allocation4 [shape = 's32[2]{0}', space=sflag, size = 0x8, scoped, tag = 'scoped memory for tpu_custom_call.1']
    #allocation5 [shape = 'u8[8192]{0}', space=vmem, size = 0x2000, scoped, tag = 'input window, operand 1']
    #allocation6 [shape = 's32[2]{0}', space=sflag, size = 0x8, scoped, tag = 'scoped memory for tpu_custom_call.1']
    #allocation7 [shape = 'u8[16384]{0}', space=vmem, size = 0x4000, scoped, tag = 'input window, operand 3, single buffered']
    #allocation8 [shape = 'u8[16384]{0}', space=vmem, size = 0x4000, scoped, tag = 'input window, operand 4, single buffered']
    #allocation9 [shape = 's32[1]{0}', space=sflag, size = 0x4, scoped, tag = 'scoped memory for tpu_custom_call.1']
    #allocation10 [shape = 'u8[16384]{0}', space=vmem, size = 0x4000, scoped, tag = 'input window, operand 5, single buffered']
    #allocation11 [shape = 'u8[8192]{0}', space=vmem, size = 0x2000, scoped, tag = 'output window, operand 0']
    #allocation12 [shape = 'u8[8192]{0}', space=vmem, size = 0x2000, scoped, tag = 'output window, operand 1']
    #allocation13 [shape = 's32[2]{0}', space=sflag, size = 0x8, scoped, tag = 'scoped memory for tpu_custom_call.1']
    %13 = vsyncpa [#allocation3], 0
    %s14 = scalar_lea.sflag [#allocation3], 1
    %15 = vsyncpa %s14, 0
    %16 = vsyncpa [#allocation6], 0
    %s17 = scalar_lea.sflag [#allocation6], 1
    %18 = vsyncpa %s17, 0
    %19 = vsyncpa [#allocation9], 0
    %20 = vsyncpa [#allocation4], 0
    %s21 = scalar_lea.sflag [#allocation4], 1
    %22 = vsyncpa %s21, 0
    %23 = vsyncpa [#allocation13], 0
    %s24 = scalar_lea.sflag [#allocation13], 1
    %25 = vsyncpa %s24, 0
    loop: start=0, step=1, limit=4
    $region2: #{tpu_custom_call.1} parent=1 // loop_pre_header
      _
    $region3: #{tpu_custom_call.1} parent=1 // loop_header
      %s27 = sphi 0, %s31
      %p28 = scmp.ge.s32.totalorder %s27, 4
      %s37 = sphi 0, %s39
      %s40 = sphi 0, %s37
      %s41 = sphi 0, %s40
      %s57 = sphi 0, %s41
      %s63 = sphi 0, %s65
      %s66 = sphi 0, %s63
      %s67 = sphi 0, %s66
      %s83 = sphi 0, %s67
      %s89 = sphi 0, %s91
      %s92 = sphi 0, %s89
      %s93 = sphi 0, %s92
      %s109 = sphi 0, %s93
      %s113 = sphi 0, %s113
      %s115 = sphi 0, %s113
      %s116 = sphi 0, %s115
      %s130 = sphi 0, %s116
      %s134 = sphi 0, %s134
      %s136 = sphi 0, %s134
      %s137 = sphi 0, %s136
      %s151 = sphi 0, %s137
      %s155 = sphi 0, %s155
      %s157 = sphi 0, %s155
      %s158 = sphi 0, %s157
      %s172 = sphi 0, %s158
      %s178 = sphi 0, %s180
      %s181 = sphi 0, %s178
      %s182 = sphi 0, %s181
      %s198 = sphi 0, %s182
      %s204 = sphi 0, %s206
      %s207 = sphi 0, %s204
      %s208 = sphi 0, %s207
      %s224 = sphi 0, %s208
    $region4: #{tpu_custom_call.1} parent=1 // loop_header_branch
      %30 = sbr.rel (%p28) target = $region8
    $region5: #{tpu_custom_call.1} parent=1 // loop_body
      %s32 = ssub.s32 %s27, 1
      %s33 = ssub.s32 %s27, 2
      %s34 = sadd.s32 %s27, 1
      %s35 = ssub.s32 %s27, %s34
      %p36 = scmp.eq.s32.totalorder %s35, 0
      %s38 = sadd.s32 %s37, 1
      %s39 = scalar_select %p36, %s37, %s38
      %p42 = pneg %p36
      %p43 = scmp.eq.s32.totalorder %s27, 1
      %p44 = por %p42, %p43
      %p45 = scmp.ne.s32.totalorder %s37, %s40
      %p46 = scmp.eq.s32.totalorder %s27, 0
      %p47 = por %p45, %p46
      %p48 = scmp.ne.s32.totalorder %s37, %s40
      %p49 = scmp.eq.s32.totalorder %s32, 1
      %p50 = por %p48, %p49
      %p51 = scmp.ne.s32.totalorder %s40, %s41
      %p52 = scmp.eq.s32.totalorder %s32, 0
      %p53 = por %p51, %p52
      %p54 = scmp.ne.s32.totalorder %s40, %s41
      %p55 = scmp.eq.s32.totalorder %s33, 1
      %p56 = por %p54, %p55
      %p58 = scmp.ne.s32.totalorder %s41, %s57
      %p59 = scmp.eq.s32.totalorder %s33, 0
      %p60 = por %p58, %p59
      %s61 = ssub.s32 %s27, %s34
      %p62 = scmp.eq.s32.totalorder %s61, 0
      %s64 = sadd.s32 %s63, 1
      %s65 = scalar_select %p62, %s63, %s64
      %p68 = pneg %p62
      %p69 = scmp.eq.s32.totalorder %s27, 1
      %p70 = por %p68, %p69
      %p71 = scmp.ne.s32.totalorder %s63, %s66
      %p72 = scmp.eq.s32.totalorder %s27, 0
      %p73 = por %p71, %p72
      %p74 = scmp.ne.s32.totalorder %s63, %s66
      %p75 = scmp.eq.s32.totalorder %s32, 1
      %p76 = por %p74, %p75
      %p77 = scmp.ne.s32.totalorder %s66, %s67
      %p78 = scmp.eq.s32.totalorder %s32, 0
      %p79 = por %p77, %p78
      %p80 = scmp.ne.s32.totalorder %s66, %s67
      %p81 = scmp.eq.s32.totalorder %s33, 1
      %p82 = por %p80, %p81
      %p84 = scmp.ne.s32.totalorder %s67, %s83
      %p85 = scmp.eq.s32.totalorder %s33, 0
      %p86 = por %p84, %p85
      %s87 = ssub.s32 %s27, %s34
      %p88 = scmp.eq.s32.totalorder %s87, 0
      %s90 = sadd.s32 %s89, 1
      %s91 = scalar_select %p88, %s89, %s90
      %p94 = pneg %p88
      %p95 = scmp.eq.s32.totalorder %s27, 1
      %p96 = por %p94, %p95
      %p97 = scmp.ne.s32.totalorder %s89, %s92
      %p98 = scmp.eq.s32.totalorder %s27, 0
      %p99 = por %p97, %p98
      %p100 = scmp.ne.s32.totalorder %s89, %s92
      %p101 = scmp.eq.s32.totalorder %s32, 1
      %p102 = por %p100, %p101
      %p103 = scmp.ne.s32.totalorder %s92, %s93
      %p104 = scmp.eq.s32.totalorder %s32, 0
      %p105 = por %p103, %p104
      %p106 = scmp.ne.s32.totalorder %s92, %s93
      %p107 = scmp.eq.s32.totalorder %s33, 1
      %p108 = por %p106, %p107
      %p110 = scmp.ne.s32.totalorder %s93, %s109
      %p111 = scmp.eq.s32.totalorder %s33, 0
      %p112 = por %p110, %p111
      %s114 = sadd.s32 %s113, 1
      %p117 = scmp.eq.s32.totalorder %s27, 1
      %p118 = scmp.ne.s32.totalorder %s113, %s115
      %p119 = scmp.eq.s32.totalorder %s27, 0
      %p120 = por %p118, %p119
      %p121 = scmp.ne.s32.totalorder %s113, %s115
      %p122 = scmp.eq.s32.totalorder %s32, 1
      %p123 = por %p121, %p122
      %p124 = scmp.ne.s32.totalorder %s115, %s116
      %p125 = scmp.eq.s32.totalorder %s32, 0
      %p126 = por %p124, %p125
      %p127 = scmp.ne.s32.totalorder %s115, %s116
      %p128 = scmp.eq.s32.totalorder %s33, 1
      %p129 = por %p127, %p128
      %p131 = scmp.ne.s32.totalorder %s116, %s130
      %p132 = scmp.eq.s32.totalorder %s33, 0
      %p133 = por %p131, %p132
      %s135 = sadd.s32 %s134, 1
      %p138 = scmp.eq.s32.totalorder %s27, 1
      %p139 = scmp.ne.s32.totalorder %s134, %s136
      %p140 = scmp.eq.s32.totalorder %s27, 0
      %p141 = por %p139, %p140
      %p142 = scmp.ne.s32.totalorder %s134, %s136
      %p143 = scmp.eq.s32.totalorder %s32, 1
      %p144 = por %p142, %p143
      %p145 = scmp.ne.s32.totalorder %s136, %s137
      %p146 = scmp.eq.s32.totalorder %s32, 0
      %p147 = por %p145, %p146
      %p148 = scmp.ne.s32.totalorder %s136, %s137
      %p149 = scmp.eq.s32.totalorder %s33, 1
      %p150 = por %p148, %p149
      %p152 = scmp.ne.s32.totalorder %s137, %s151
      %p153 = scmp.eq.s32.totalorder %s33, 0
      %p154 = por %p152, %p153
      %s156 = sadd.s32 %s155, 1
      %p159 = scmp.eq.s32.totalorder %s27, 1
      %p160 = scmp.ne.s32.totalorder %s155, %s157
      %p161 = scmp.eq.s32.totalorder %s27, 0
      %p162 = por %p160, %p161
      %p163 = scmp.ne.s32.totalorder %s155, %s157
      %p164 = scmp.eq.s32.totalorder %s32, 1
      %p165 = por %p163, %p164
      %p166 = scmp.ne.s32.totalorder %s157, %s158
      %p167 = scmp.eq.s32.totalorder %s32, 0
      %p168 = por %p166, %p167
      %p169 = scmp.ne.s32.totalorder %s157, %s158
      %p170 = scmp.eq.s32.totalorder %s33, 1
      %p171 = por %p169, %p170
      %p173 = scmp.ne.s32.totalorder %s158, %s172
      %p174 = scmp.eq.s32.totalorder %s33, 0
      %p175 = por %p173, %p174
      %s176 = ssub.s32 %s27, %s34
      %p177 = scmp.eq.s32.totalorder %s176, 0
      %s179 = sadd.s32 %s178, 1
      %s180 = scalar_select %p177, %s178, %s179
      %p183 = pneg %p177
      %p184 = scmp.eq.s32.totalorder %s27, 1
      %p185 = por %p183, %p184
      %p186 = scmp.ne.s32.totalorder %s178, %s181
      %p187 = scmp.eq.s32.totalorder %s27, 0
      %p188 = por %p186, %p187
      %p189 = scmp.ne.s32.totalorder %s178, %s181
      %p190 = scmp.eq.s32.totalorder %s32, 1
      %p191 = por %p189, %p190
      %p192 = scmp.ne.s32.totalorder %s181, %s182
      %p193 = scmp.eq.s32.totalorder %s32, 0
      %p194 = por %p192, %p193
      %p195 = scmp.ne.s32.totalorder %s181, %s182
      %p196 = scmp.eq.s32.totalorder %s33, 1
      %p197 = por %p195, %p196
      %p199 = scmp.ne.s32.totalorder %s182, %s198
      %p200 = scmp.eq.s32.totalorder %s33, 0
      %p201 = por %p199, %p200
      %s202 = ssub.s32 %s27, %s34
      %p203 = scmp.eq.s32.totalorder %s202, 0
      %s205 = sadd.s32 %s204, 1
      %s206 = scalar_select %p203, %s204, %s205
      %p209 = pneg %p203
      %p210 = scmp.eq.s32.totalorder %s27, 1
      %p211 = por %p209, %p210
      %p212 = scmp.ne.s32.totalorder %s204, %s207
      %p213 = scmp.eq.s32.totalorder %s27, 0
      %p214 = por %p212, %p213
      %p215 = scmp.ne.s32.totalorder %s204, %s207
      %p216 = scmp.eq.s32.totalorder %s32, 1
      %p217 = por %p215, %p216
      %p218 = scmp.ne.s32.totalorder %s207, %s208
      %p219 = scmp.eq.s32.totalorder %s32, 0
      %p220 = por %p218, %p219
      %p221 = scmp.ne.s32.totalorder %s207, %s208
      %p222 = scmp.eq.s32.totalorder %s33, 1
      %p223 = por %p221, %p222
      %p225 = scmp.ne.s32.totalorder %s208, %s224
      %p226 = scmp.eq.s32.totalorder %s33, 0
      %p227 = por %p225, %p226
      %p228 = scmp.le.s32.totalorder 1, %s27
      %p229 = scmp.lt.s32.totalorder %s27, 3
      %p230 = pnand %p228, %p229
      %p231 = pneg %p230
      // Predicated region
      $region9: #{tpu_custom_call.1} parent=5 // pred_check
        _
      $region10: #{tpu_custom_call.1} parent=5 // pred_check_branch
        %233 = sbr.rel (%p230) target = $region12
      $region11: #{tpu_custom_call.1} parent=5 // pred_region
        %s234 = ssub.s32 %s27, 1
        // Predicated region
        $region13: #{tpu_custom_call.1} parent=11 // pred_check
          %p235 = pneg %p126
        $region14: #{tpu_custom_call.1} parent=11 // pred_check_branch
          %237 = sbr.rel (%p235) target = $region16
        $region15: #{tpu_custom_call.1} parent=11 // pred_region
          %s239 = ssub.s32 512, 512
          %240 = vsyncadd [#allocation6], %s239
          %s241 = sshll.u32 [#allocation7], 4
          %s242 = int_to_ptr.vmem [resolvable:$true] %s241
          %247 = dma.hbm_to_vmem [thread:$0]  %s3, 512, %s242, [#allocation6], 128, 128, 8
        $region16: #{tpu_custom_call.1} parent=11 // pred_fallthru
          _
        // Predicated region
        $region17: #{tpu_custom_call.1} parent=11 // pred_check
          %p248 = pneg %p147
        $region18: #{tpu_custom_call.1} parent=11 // pred_check_branch
          %250 = sbr.rel (%p248) target = $region20
        $region19: #{tpu_custom_call.1} parent=11 // pred_region
          %s252 = ssub.s32 512, 512
          %253 = vsyncadd [#allocation9], %s252
          %s254 = sshll.u32 [#allocation8], 4
          %s255 = int_to_ptr.vmem [resolvable:$true] %s254
          %260 = dma.hbm_to_vmem [thread:$0]  %s4, 512, %s255, [#allocation9], 128, 128, 8
        $region20: #{tpu_custom_call.1} parent=11 // pred_fallthru
          _
        // Predicated region
        $region21: #{tpu_custom_call.1} parent=11 // pred_check
          %p261 = pneg %p168
        $region22: #{tpu_custom_call.1} parent=11 // pred_check_branch
          %263 = sbr.rel (%p261) target = $region24
        $region23: #{tpu_custom_call.1} parent=11 // pred_region
          %s265 = ssub.s32 512, 512
          %266 = vsyncadd [#allocation9], %s265
          %s267 = sshll.u32 [#allocation10], 4
          %s268 = int_to_ptr.vmem [resolvable:$true] %s267
          %273 = dma.hbm_to_vmem [thread:$0]  %s5, 512, %s268, [#allocation9], 128, 128, 8
        $region24: #{tpu_custom_call.1} parent=11 // pred_fallthru
          _
      $region12: #{tpu_custom_call.1} parent=5 // pred_fallthru
        _
      %p274 = scmp.lt.s32.totalorder %s27, 2
      // Predicated region
      $region25: #{tpu_custom_call.1} parent=5 // pred_check
        %p275 = pneg %p274
      $region26: #{tpu_custom_call.1} parent=5 // pred_check_branch
        %277 = sbr.rel (%p275) target = $region28
      $region27: #{tpu_custom_call.1} parent=5 // pred_region
        // Predicated region
        $region29: #{tpu_custom_call.1} parent=27 // pred_check
          %p278 = pneg %p47
        $region30: #{tpu_custom_call.1} parent=27 // pred_check_branch
          %280 = sbr.rel (%p278) target = $region32
        $region31: #{tpu_custom_call.1} parent=27 // pred_region
          %s281 = sand.u32 %s37, 1
          %s282 = scalar_lea.sflag [#allocation3], %s281
          %s283 = sand.u32 %s37, 1
          %s284 = smul.addr %s283, 8
          %s285 = scalar_lea.vmem [#allocation2], %s284
          %s287 = ssub.s32 128, 128
          %288 = vsyncadd %s282, %s287
          %s289 = smul.addr %s27, 128
          %s290 = scalar_lea.hbm %s0, %s289
          %s292 = sshll.u32 %s285, 4
          %s293 = int_to_ptr.vmem [resolvable:$true] %s292
          %295 = dma.hbm_to_vmem [thread:$0]  %s290, 128, %s293, %s282
        $region32: #{tpu_custom_call.1} parent=27 // pred_fallthru
          _
        // Predicated region
        $region33: #{tpu_custom_call.1} parent=27 // pred_check
          %p296 = pneg %p73
        $region34: #{tpu_custom_call.1} parent=27 // pred_check_branch
          %298 = sbr.rel (%p296) target = $region36
        $region35: #{tpu_custom_call.1} parent=27 // pred_region
          %s299 = sand.u32 %s27, 1
          %s300 = scalar_lea.sflag [#allocation6], %s299
          %s301 = sand.u32 %s63, 1
          %s302 = smul.addr %s301, 8
          %s303 = scalar_lea.vmem [#allocation5], %s302
          %s305 = ssub.s32 128, 128
          %306 = vsyncadd %s300, %s305
          %s307 = smul.addr %s27, 128
          %s308 = scalar_lea.hbm %s1, %s307
          %s310 = sshll.u32 %s303, 4
          %s311 = int_to_ptr.vmem [resolvable:$true] %s310
          %313 = dma.hbm_to_vmem [thread:$0]  %s308, 128, %s311, %s300
        $region36: #{tpu_custom_call.1} parent=27 // pred_fallthru
          _
        // Predicated region
        $region37: #{tpu_custom_call.1} parent=27 // pred_check
          %p314 = pneg %p99
        $region38: #{tpu_custom_call.1} parent=27 // pred_check_branch
          %316 = sbr.rel (%p314) target = $region40
        $region39: #{tpu_custom_call.1} parent=27 // pred_region
          %p317 = scmp.lt.s32.totalorder %s27, 1
          %s318 = scalar_select %p317, %s27, 1
          %s319 = scalar_lea.vmem %s2, %s318
        $region40: #{tpu_custom_call.1} parent=27 // pred_fallthru
          _
      $region28: #{tpu_custom_call.1} parent=5 // pred_fallthru
        _
      %p320 = scmp.le.s32.totalorder 1, %s27
      %p321 = scmp.lt.s32.totalorder %s27, 3
      %p322 = pnand %p320, %p321
      %p323 = pneg %p322
      // Predicated region
      $region41: #{tpu_custom_call.1} parent=5 // pred_check
        _
      $region42: #{tpu_custom_call.1} parent=5 // pred_check_branch
        %325 = sbr.rel (%p322) target = $region44
      $region43: #{tpu_custom_call.1} parent=5 // pred_region
        %s326 = ssub.s32 %s27, 1
        %s327 = sand.u32 %s40, 1
        %s328 = scalar_lea.sflag [#allocation3], %s327
        %s329 = sand.u32 %s40, 1
        %s330 = smul.addr %s329, 8
        %s331 = scalar_lea.vmem [#allocation2], %s330
        // Predicated region
        $region45: #{tpu_custom_call.1} parent=43 // pred_check
          %p332 = pneg %p53
        $region46: #{tpu_custom_call.1} parent=43 // pred_check_branch
          %334 = sbr.rel (%p332) target = $region48
        $region47: #{tpu_custom_call.1} parent=43 // pred_region
          %335 = dma.done %s328, 128
        $region48: #{tpu_custom_call.1} parent=43 // pred_fallthru
          _
        %s336 = sand.u32 %s32, 1
        %s337 = scalar_lea.sflag [#allocation6], %s336
        %s338 = sand.u32 %s66, 1
        %s339 = smul.addr %s338, 8
        %s340 = scalar_lea.vmem [#allocation5], %s339
        // Predicated region
        $region49: #{tpu_custom_call.1} parent=43 // pred_check
          %p341 = pneg %p79
        $region50: #{tpu_custom_call.1} parent=43 // pred_check_branch
          %343 = sbr.rel (%p341) target = $region52
        $region51: #{tpu_custom_call.1} parent=43 // pred_region
          %344 = dma.done %s337, 128
        $region52: #{tpu_custom_call.1} parent=43 // pred_fallthru
          _
        // Predicated region
        $region53: #{tpu_custom_call.1} parent=43 // pred_check
          %p345 = pneg %p126
        $region54: #{tpu_custom_call.1} parent=43 // pred_check_branch
          %347 = sbr.rel (%p345) target = $region56
        $region55: #{tpu_custom_call.1} parent=43 // pred_region
          %348 = dma.done [#allocation6], 512
        $region56: #{tpu_custom_call.1} parent=43 // pred_fallthru
          _
        // Predicated region
        $region57: #{tpu_custom_call.1} parent=43 // pred_check
          %p349 = pneg %p147
        $region58: #{tpu_custom_call.1} parent=43 // pred_check_branch
          %351 = sbr.rel (%p349) target = $region60
        $region59: #{tpu_custom_call.1} parent=43 // pred_region
          %352 = dma.done [#allocation9], 512
        $region60: #{tpu_custom_call.1} parent=43 // pred_fallthru
          _
        // Predicated region
        $region61: #{tpu_custom_call.1} parent=43 // pred_check
          %p353 = pneg %p168
        $region62: #{tpu_custom_call.1} parent=43 // pred_check_branch
          %355 = sbr.rel (%p353) target = $region64
        $region63: #{tpu_custom_call.1} parent=43 // pred_region
          %356 = dma.done [#allocation9], 512
        $region64: #{tpu_custom_call.1} parent=43 // pred_fallthru
          _
        %s357 = sand.u32 %s40, 1
        %s358 = scalar_lea.sflag [#allocation3], %s357
        %s359 = sand.u32 %s40, 1
        %s360 = smul.addr %s359, 8
        %s361 = scalar_lea.vmem [#allocation2], %s360
        %p362 = pneg %p53
        %p363 = pneg %p50
        %s364 = sand.u32 %s32, 1
        %s365 = scalar_lea.sflag [#allocation6], %s364
        %s366 = sand.u32 %s66, 1
        %s367 = smul.addr %s366, 8
        %s368 = scalar_lea.vmem [#allocation5], %s367
        %p369 = pneg %p79
        %p370 = pneg %p76
        %p371 = scmp.lt.s32.totalorder %s32, 1
        %s372 = scalar_select %p371, %s32, 1
        %s373 = scalar_lea.vmem %s2, %s372
        %p374 = pneg %p105
        %p375 = pneg %p102
        %p376 = pneg %p126
        %p377 = pneg %p123
        %p378 = pneg %p147
        %p379 = pneg %p144
        %p380 = pneg %p168
        %p381 = pneg %p165
        %p382 = pneg %p194
        %p383 = pneg %p191
        %s384 = sand.u32 %s181, 1
        %s385 = scalar_lea.sflag [#allocation4], %s384
        %s386 = sand.u32 %s181, 1
        %s387 = smul.addr %s386, 8
        %s388 = scalar_lea.vmem [#allocation11], %s387
        %p389 = pneg %p220
        %p390 = pneg %p217
        %s391 = sand.u32 %s207, 1
        %s392 = scalar_lea.sflag [#allocation13], %s391
        %s393 = sand.u32 %s207, 1
        %s394 = smul.addr %s393, 8
        %s395 = scalar_lea.vmem [#allocation12], %s394
        %p396 = scmp.lt.s32.totalorder %s32, 1
        %s397 = scalar_select %p396, %s32, 1
        %s398 = scalar_lea.vmem %s2, %s397
        %v399 = vld [vmem:[%s331] sm:$0xff]
        %v400 = vld [vmem:[%s340] sm:$0xff]
        %v401 = vld [vmem:[%s398] sm:$0x1]
        %v402 = vld [vmem:[#allocation7] sm:$0xff]
        %v403 = vld [vmem:[#allocation7 + $0x8] sm:$0xff]
        %v404 = vld [vmem:[#allocation7 + $0x10] sm:$0xff]
        %v405 = vld [vmem:[#allocation7 + $0x18] sm:$0xff]
        %vm406 = vcmask 261120
        %v408 = vsel %vm406, %v399, 0
        %410 = vmatprep.subr.mxu0 0.0
        %411 = vmatpush1.msra.mxu0 0.0
        %412 = vmatprep.subr.mxu0 0.0
        %413 = vmatpush1.msra.mxu0 0.0
        %414 = vmatprep.subr.mxu0 0.0
        %415 = vmatpush1.msra.mxu0 0.0
        %416 = vmatprep.subr.mxu0 0.0
        %417 = vmatpush1.msra.mxu0 0.0
        %418 = vmatprep.subr.mxu0 0.0
        %419 = vmatpush1.msra.mxu0 0.0
        %420 = vmatprep.subr.mxu0 0.0
        %421 = vmatpush1.msra.mxu0 0.0
        %422 = vmatprep.subr.mxu0 0.0
        %423 = vmatpush1.msra.mxu0 0.0
        %424 = vmatprep.subr.mxu0 0.0
        %425 = vmatpush1.msra.mxu0 0.0
        %426 = vmatprep.subr.mxu0 0.0
        %427 = vmatpush1.msra.mxu0 0.0
        %428 = vmatprep.subr.mxu0 0.0
        %429 = vmatpush1.msra.mxu0 0.0
        %430 = vmatprep.subr.mxu0 0.0
        %431 = vmatpush1.msra.mxu0 0.0
        %432 = vmatprep.subr.mxu0 0.0
        %433 = vmatpush1.msra.mxu0 0.0
        %434 = vmatprep.subr.mxu0 0.0
        %435 = vmatpush1.msra.mxu0 %v405
        %436 = vmatprep.subr.mxu0 0.0
        %437 = vmatpush1.msra.mxu0 %v404
        %438 = vmatprep.subr.mxu0 0.0
        %439 = vmatpush1.msra.mxu0 %v403
        %440 = vmatprep.subr.mxu0 0.0
        %441 = vmatpush1.msra.mxu0 %v402
        %442 = vmatprep.subr.mxu0 0.0
        %443 = vmatpush2.msra.mxu0 0.0
        %444 = vmatprep.subr.mxu0 0.0
        %445 = vmatpush2.msra.mxu0 0.0
        %446 = vmatprep.subr.mxu0 0.0
        %447 = vmatpush2.msra.mxu0 0.0
        %448 = vmatprep.subr.mxu0 0.0
        %449 = vmatpush2.msra.mxu0 0.0
        %450 = vmatprep.subr.mxu0 0.0
        %451 = vmatpush2.msra.mxu0 0.0
        %452 = vmatprep.subr.mxu0 0.0
        %453 = vmatpush2.msra.mxu0 0.0
        %454 = vmatprep.subr.mxu0 0.0
        %455 = vmatpush2.msra.mxu0 0.0
        %456 = vmatprep.subr.mxu0 0.0
        %457 = vmatpush2.msra.mxu0 0.0
        %458 = vmatprep.subr.mxu0 0.0
        %459 = vmatpush2.msra.mxu0 0.0
        %460 = vmatprep.subr.mxu0 0.0
        %461 = vmatpush2.msra.mxu0 0.0
        %462 = vmatprep.subr.mxu0 0.0
        %463 = vmatpush2.msra.mxu0 0.0
        %464 = vmatprep.subr.mxu0 0.0
        %465 = vmatpush2.msra.mxu0 0.0
        %466 = vmatprep.subr.mxu0 0.0
        %467 = vmatpush2.msra.mxu0 0.0
        %468 = vmatprep.subr.mxu0 0.0
        %469 = vmatpush2.msra.mxu0 0.0
        %470 = vmatprep.subr.mxu0 0.0
        %471 = vmatpush2.msra.mxu0 0.0
        %472 = vmatprep.subr.mxu0 0.0
        %473 = vmatpush2.msra.mxu0 0.0
        %474 = vmatprep.mubr.f32.mxu0 0.0
        %475 = vmatmul.mubr.f32.gmra.mxu0 %v408
        %v476 = vpop.f32.mrf.mxu0
        %v477 = vadd.f32 0.0, %v476
        %v478 = vpop.f32.mrf.mxu0
        %479 = vdwg.mxu0
        %v481 = vlaneseq
        %v482 = vshrl.u32 %v481, 7
        %v483 = vsub.s32 0, %v482
        %v484 = vrot.slane %v401, %v483
        %v487 = vsel %vm406, %v477, 0
        %v490 = vsel %vm406, %v400, 0
        %492 = vmatprep.subr.mxu0 0.0
        %493 = vmatpush1.xpose.msra.mxu0 0.0
        %494 = vmatprep.subr.mxu0 0.0
        %495 = vmatpush1.xpose.msra.mxu0 0.0
        %496 = vmatprep.subr.mxu0 0.0
        %497 = vmatpush1.xpose.msra.mxu0 0.0
        %498 = vmatprep.subr.mxu0 0.0
        %499 = vmatpush1.xpose.msra.mxu0 0.0
        %500 = vmatprep.subr.mxu0 0.0
        %501 = vmatpush1.xpose.msra.mxu0 0.0
        %502 = vmatprep.subr.mxu0 0.0
        %503 = vmatpush1.xpose.msra.mxu0 0.0
        %504 = vmatprep.subr.mxu0 0.0
        %505 = vmatpush1.xpose.msra.mxu0 0.0
        %506 = vmatprep.subr.mxu0 0.0
        %507 = vmatpush1.xpose.msra.mxu0 0.0
        %508 = vmatprep.subr.mxu0 0.0
        %509 = vmatpush1.xpose.msra.mxu0 0.0
        %510 = vmatprep.subr.mxu0 0.0
        %511 = vmatpush1.xpose.msra.mxu0 0.0
        %512 = vmatprep.subr.mxu0 0.0
        %513 = vmatpush1.xpose.msra.mxu0 0.0
        %514 = vmatprep.subr.mxu0 0.0
        %515 = vmatpush1.xpose.msra.mxu0 0.0
        %516 = vmatprep.subr.mxu0 0.0
        %517 = vmatpush1.xpose.msra.mxu0 0.0
        %518 = vmatprep.subr.mxu0 0.0
        %519 = vmatpush1.xpose.msra.mxu0 0.0
        %520 = vmatprep.subr.mxu0 0.0
        %521 = vmatpush1.xpose.msra.mxu0 0.0
        %522 = vmatprep.subr.mxu0 0.0
        %523 = vmatpush1.xpose.msra.mxu0 %v490
        %524 = vmatprep.subr.mxu0 0.0
        %525 = vmatpush2.xpose.msra.mxu0 0.0
        %526 = vmatprep.subr.mxu0 0.0
        %527 = vmatpush2.xpose.msra.mxu0 0.0
        %528 = vmatprep.subr.mxu0 0.0
        %529 = vmatpush2.xpose.msra.mxu0 0.0
        %530 = vmatprep.subr.mxu0 0.0
        %531 = vmatpush2.xpose.msra.mxu0 0.0
        %532 = vmatprep.subr.mxu0 0.0
        %533 = vmatpush2.xpose.msra.mxu0 0.0
        %534 = vmatprep.subr.mxu0 0.0
        %535 = vmatpush2.xpose.msra.mxu0 0.0
        %536 = vmatprep.subr.mxu0 0.0
        %537 = vmatpush2.xpose.msra.mxu0 0.0
        %538 = vmatprep.subr.mxu0 0.0
        %539 = vmatpush2.xpose.msra.mxu0 0.0
        %540 = vmatprep.subr.mxu0 0.0
        %541 = vmatpush2.xpose.msra.mxu0 0.0
        %542 = vmatprep.subr.mxu0 0.0
        %543 = vmatpush2.xpose.msra.mxu0 0.0
        %544 = vmatprep.subr.mxu0 0.0
        %545 = vmatpush2.xpose.msra.mxu0 0.0
        %546 = vmatprep.subr.mxu0 0.0
        %547 = vmatpush2.xpose.msra.mxu0 0.0
        %548 = vmatprep.subr.mxu0 0.0
        %549 = vmatpush2.xpose.msra.mxu0 0.0
        %550 = vmatprep.subr.mxu0 0.0
        %551 = vmatpush2.xpose.msra.mxu0 0.0
        %552 = vmatprep.subr.mxu0 0.0
        %553 = vmatpush2.xpose.msra.mxu0 0.0
        %554 = vmatprep.subr.mxu0 0.0
        %555 = vmatpush2.xpose.msra.mxu0 0.0
        %556 = vmatprep.mubr.f32.mxu0 0.0
        %557 = vmatmul.mubr.f32.gmra.mxu0 %v487
        %v558 = vpop.f32.mrf.mxu0
        %v559 = vadd.f32 %v484, %v558
        %v560 = vpop.f32.mrf.mxu0
        %561 = vdwg.mxu0
        %vm562 = vcmask 64512
        %v563 = vsel %vm562, %v559, -inf
        %564 = vmax.xlane.f32.xlu0 %v563
        %v565 = vpop.xlane.xlu0 %564
        %v566 = vsub.f32 %v559, %v565
        %v567 = vmul.f32 %v566, 1.442695
        %v568 = vpow.pop %v567
        %v569 = vsel %vm562, %v568, 0.0
        %570 = vadd.xlane.f32.xlu0 %v569
        %v571 = vpop.xlane.xlu0 %570
        %v572 = vrcp.pop %v571
        %v573 = vmul.f32 %v568, %v572
        %574 = vst.msk [vmem:[%s395] sm:$0xff] %vm562, %v573
        %v576 = vsel %vm562, %v573, 0
        %578 = vmatprep.subr.mxu0 0.0
        %579 = vmatpush1.msra.mxu0 0.0
        %580 = vmatprep.subr.mxu0 0.0
        %581 = vmatpush1.msra.mxu0 0.0
        %582 = vmatprep.subr.mxu0 0.0
        %583 = vmatpush1.msra.mxu0 0.0
        %584 = vmatprep.subr.mxu0 0.0
        %585 = vmatpush1.msra.mxu0 0.0
        %586 = vmatprep.subr.mxu0 0.0
        %587 = vmatpush1.msra.mxu0 0.0
        %588 = vmatprep.subr.mxu0 0.0
        %589 = vmatpush1.msra.mxu0 0.0
        %590 = vmatprep.subr.mxu0 0.0
        %591 = vmatpush1.msra.mxu0 0.0
        %592 = vmatprep.subr.mxu0 0.0
        %593 = vmatpush1.msra.mxu0 0.0
        %594 = vmatprep.subr.mxu0 0.0
        %595 = vmatpush1.msra.mxu0 0.0
        %596 = vmatprep.subr.mxu0 0.0
        %597 = vmatpush1.msra.mxu0 0.0
        %598 = vmatprep.subr.mxu0 0.0
        %599 = vmatpush1.msra.mxu0 0.0
        %600 = vmatprep.subr.mxu0 0.0
        %601 = vmatpush1.msra.mxu0 0.0
        %602 = vmatprep.subr.mxu0 0.0
        %603 = vmatpush1.msra.mxu0 0.0
        %604 = vmatprep.subr.mxu0 0.0
        %605 = vmatpush1.msra.mxu0 0.0
        %606 = vmatprep.subr.mxu0 0.0
        %607 = vmatpush1.msra.mxu0 0.0
        %608 = vmatprep.subr.mxu0 0.0
        %609 = vmatpush1.msra.mxu0 %v400
        %610 = vmatprep.subr.mxu0 0.0
        %611 = vmatpush2.msra.mxu0 0.0
        %612 = vmatprep.subr.mxu0 0.0
        %613 = vmatpush2.msra.mxu0 0.0
        %614 = vmatprep.subr.mxu0 0.0
        %615 = vmatpush2.msra.mxu0 0.0
        %616 = vmatprep.subr.mxu0 0.0
        %617 = vmatpush2.msra.mxu0 0.0
        %618 = vmatprep.subr.mxu0 0.0
        %619 = vmatpush2.msra.mxu0 0.0
        %620 = vmatprep.subr.mxu0 0.0
        %621 = vmatpush2.msra.mxu0 0.0
        %622 = vmatprep.subr.mxu0 0.0
        %623 = vmatpush2.msra.mxu0 0.0
        %624 = vmatprep.subr.mxu0 0.0
        %625 = vmatpush2.msra.mxu0 0.0
        %626 = vmatprep.subr.mxu0 0.0
        %627 = vmatpush2.msra.mxu0 0.0
        %628 = vmatprep.subr.mxu0 0.0
        %629 = vmatpush2.msra.mxu0 0.0
        %630 = vmatprep.subr.mxu0 0.0
        %631 = vmatpush2.msra.mxu0 0.0
        %632 = vmatprep.subr.mxu0 0.0
        %633 = vmatpush2.msra.mxu0 0.0
        %634 = vmatprep.subr.mxu0 0.0
        %635 = vmatpush2.msra.mxu0 0.0
        %636 = vmatprep.subr.mxu0 0.0
        %637 = vmatpush2.msra.mxu0 0.0
        %638 = vmatprep.subr.mxu0 0.0
        %639 = vmatpush2.msra.mxu0 0.0
        %640 = vmatprep.subr.mxu0 0.0
        %641 = vmatpush2.msra.mxu0 0.0
        %642 = vmatprep.mubr.f32.mxu0 0.0
        %643 = vmatmul.mubr.f32.gmra.mxu0 %v576
        %v644 = vpop.f32.mrf.mxu0
        %v645 = vadd.f32 0.0, %v644
        %v646 = vpop.f32.mrf.mxu0
        %647 = vdwg.mxu0
        %v648 = vld [vmem:[#allocation8] sm:$0xff]
        %v649 = vld [vmem:[#allocation8 + $0x8] sm:$0xff]
        %v650 = vld [vmem:[#allocation8 + $0x10] sm:$0xff]
        %v651 = vld [vmem:[#allocation8 + $0x18] sm:$0xff]
        %v652 = vld [vmem:[#allocation10] sm:$0xff]
        %v653 = vld [vmem:[#allocation10 + $0x8] sm:$0xff]
        %v654 = vld [vmem:[#allocation10 + $0x10] sm:$0xff]
        %v655 = vld [vmem:[#allocation10 + $0x18] sm:$0xff]
        %656 = vmatprep.subr.mxu0 0.0
        %657 = vmatpush1.msra.mxu0 0.0
        %658 = vmatprep.subr.mxu0 0.0
        %659 = vmatpush1.msra.mxu0 0.0
        %660 = vmatprep.subr.mxu0 0.0
        %661 = vmatpush1.msra.mxu0 0.0
        %662 = vmatprep.subr.mxu0 0.0
        %663 = vmatpush1.msra.mxu0 0.0
        %664 = vmatprep.subr.mxu0 0.0
        %665 = vmatpush1.msra.mxu0 0.0
        %666 = vmatprep.subr.mxu0 0.0
        %667 = vmatpush1.msra.mxu0 0.0
        %668 = vmatprep.subr.mxu0 0.0
        %669 = vmatpush1.msra.mxu0 0.0
        %670 = vmatprep.subr.mxu0 0.0
        %671 = vmatpush1.msra.mxu0 0.0
        %672 = vmatprep.subr.mxu0 0.0
        %673 = vmatpush1.msra.mxu0 0.0
        %674 = vmatprep.subr.mxu0 0.0
        %675 = vmatpush1.msra.mxu0 0.0
        %676 = vmatprep.subr.mxu0 0.0
        %677 = vmatpush1.msra.mxu0 0.0
        %678 = vmatprep.subr.mxu0 0.0
        %679 = vmatpush1.msra.mxu0 0.0
        %680 = vmatprep.subr.mxu0 0.0
        %681 = vmatpush1.msra.mxu0 %v655
        %682 = vmatprep.subr.mxu0 0.0
        %683 = vmatpush1.msra.mxu0 %v654
        %684 = vmatprep.subr.mxu0 0.0
        %685 = vmatpush1.msra.mxu0 %v653
        %686 = vmatprep.subr.mxu0 0.0
        %687 = vmatpush1.msra.mxu0 %v652
        %688 = vmatprep.subr.mxu0 0.0
        %689 = vmatpush2.msra.mxu0 0.0
        %690 = vmatprep.subr.mxu0 0.0
        %691 = vmatpush2.msra.mxu0 0.0
        %692 = vmatprep.subr.mxu0 0.0
        %693 = vmatpush2.msra.mxu0 0.0
        %694 = vmatprep.subr.mxu0 0.0
        %695 = vmatpush2.msra.mxu0 0.0
        %696 = vmatprep.subr.mxu0 0.0
        %697 = vmatpush2.msra.mxu0 0.0
        %698 = vmatprep.subr.mxu0 0.0
        %699 = vmatpush2.msra.mxu0 0.0
        %700 = vmatprep.subr.mxu0 0.0
        %701 = vmatpush2.msra.mxu0 0.0
        %702 = vmatprep.subr.mxu0 0.0
        %703 = vmatpush2.msra.mxu0 0.0
        %704 = vmatprep.subr.mxu0 0.0
        %705 = vmatpush2.msra.mxu0 0.0
        %706 = vmatprep.subr.mxu0 0.0
        %707 = vmatpush2.msra.mxu0 0.0
        %708 = vmatprep.subr.mxu0 0.0
        %709 = vmatpush2.msra.mxu0 0.0
        %710 = vmatprep.subr.mxu0 0.0
        %711 = vmatpush2.msra.mxu0 0.0
        %712 = vmatprep.subr.mxu0 0.0
        %713 = vmatpush2.msra.mxu0 0.0
        %714 = vmatprep.subr.mxu0 0.0
        %715 = vmatpush2.msra.mxu0 0.0
        %716 = vmatprep.subr.mxu0 0.0
        %717 = vmatpush2.msra.mxu0 0.0
        %718 = vmatprep.subr.mxu0 0.0
        %719 = vmatpush2.msra.mxu0 0.0
        %720 = vmatprep.mubr.f32.mxu0 0.0
        %721 = vmatmul.mubr.f32.gmra.mxu0 %v408
        %v722 = vpop.f32.mrf.mxu0
        %v723 = vadd.f32 0.0, %v722
        %v724 = vpop.f32.mrf.mxu0
        %725 = vdwg.mxu0
        %v727 = vsel %vm406, %v645, 0
        %729 = vmatprep.subr.mxu0 0.0
        %730 = vmatpush1.msra.mxu0 0.0
        %731 = vmatprep.subr.mxu0 0.0
        %732 = vmatpush1.msra.mxu0 0.0
        %733 = vmatprep.subr.mxu0 0.0
        %734 = vmatpush1.msra.mxu0 0.0
        %735 = vmatprep.subr.mxu0 0.0
        %736 = vmatpush1.msra.mxu0 0.0
        %737 = vmatprep.subr.mxu0 0.0
        %738 = vmatpush1.msra.mxu0 0.0
        %739 = vmatprep.subr.mxu0 0.0
        %740 = vmatpush1.msra.mxu0 0.0
        %741 = vmatprep.subr.mxu0 0.0
        %742 = vmatpush1.msra.mxu0 0.0
        %743 = vmatprep.subr.mxu0 0.0
        %744 = vmatpush1.msra.mxu0 0.0
        %745 = vmatprep.subr.mxu0 0.0
        %746 = vmatpush1.msra.mxu0 0.0
        %747 = vmatprep.subr.mxu0 0.0
        %748 = vmatpush1.msra.mxu0 0.0
        %749 = vmatprep.subr.mxu0 0.0
        %750 = vmatpush1.msra.mxu0 0.0
        %751 = vmatprep.subr.mxu0 0.0
        %752 = vmatpush1.msra.mxu0 0.0
        %753 = vmatprep.subr.mxu0 0.0
        %754 = vmatpush1.msra.mxu0 %v651
        %755 = vmatprep.subr.mxu0 0.0
        %756 = vmatpush1.msra.mxu0 %v650
        %757 = vmatprep.subr.mxu0 0.0
        %758 = vmatpush1.msra.mxu0 %v649
        %759 = vmatprep.subr.mxu0 0.0
        %760 = vmatpush1.msra.mxu0 %v648
        %761 = vmatprep.subr.mxu0 0.0
        %762 = vmatpush2.msra.mxu0 0.0
        %763 = vmatprep.subr.mxu0 0.0
        %764 = vmatpush2.msra.mxu0 0.0
        %765 = vmatprep.subr.mxu0 0.0
        %766 = vmatpush2.msra.mxu0 0.0
        %767 = vmatprep.subr.mxu0 0.0
        %768 = vmatpush2.msra.mxu0 0.0
        %769 = vmatprep.subr.mxu0 0.0
        %770 = vmatpush2.msra.mxu0 0.0
        %771 = vmatprep.subr.mxu0 0.0
        %772 = vmatpush2.msra.mxu0 0.0
        %773 = vmatprep.subr.mxu0 0.0
        %774 = vmatpush2.msra.mxu0 0.0
        %775 = vmatprep.subr.mxu0 0.0
        %776 = vmatpush2.msra.mxu0 0.0
        %777 = vmatprep.subr.mxu0 0.0
        %778 = vmatpush2.msra.mxu0 0.0
        %779 = vmatprep.subr.mxu0 0.0
        %780 = vmatpush2.msra.mxu0 0.0
        %781 = vmatprep.subr.mxu0 0.0
        %782 = vmatpush2.msra.mxu0 0.0
        %783 = vmatprep.subr.mxu0 0.0
        %784 = vmatpush2.msra.mxu0 0.0
        %785 = vmatprep.subr.mxu0 0.0
        %786 = vmatpush2.msra.mxu0 0.0
        %787 = vmatprep.subr.mxu0 0.0
        %788 = vmatpush2.msra.mxu0 0.0
        %789 = vmatprep.subr.mxu0 0.0
        %790 = vmatpush2.msra.mxu0 0.0
        %791 = vmatprep.subr.mxu0 0.0
        %792 = vmatpush2.msra.mxu0 0.0
        %793 = vmatprep.mubr.f32.mxu0 0.0
        %794 = vmatmul.mubr.f32.gmra.mxu0 %v727
        %v795 = vpop.f32.mrf.mxu0
        %v796 = vadd.f32 %v723, %v795
        %v797 = vpop.f32.mrf.mxu0
        %798 = vdwg.mxu0
        %v799 = vtanh.pop %v796
        %800 = vst.msk [vmem:[%s388] sm:$0xff] %vm406, %v799
        %s801 = sand.u32 %s181, 1
        %s802 = scalar_lea.sflag [#allocation4], %s801
        %s803 = sand.u32 %s181, 1
        %s804 = smul.addr %s803, 8
        %s805 = scalar_lea.vmem [#allocation11], %s804
        %s806 = sand.u32 %s207, 1
        %s807 = scalar_lea.sflag [#allocation13], %s806
        %s808 = sand.u32 %s207, 1
        %s809 = smul.addr %s808, 8
        %s810 = scalar_lea.vmem [#allocation12], %s809
        // Predicated region
        $region65: #{tpu_custom_call.1} parent=43 // pred_check
          %p811 = pneg %p191
        $region66: #{tpu_custom_call.1} parent=43 // pred_check_branch
          %813 = sbr.rel (%p811) target = $region68
        $region67: #{tpu_custom_call.1} parent=43 // pred_region
          %s815 = ssub.s32 128, 128
          %816 = vsyncadd %s802, %s815
          %s817 = smul.addr %s32, 128
          %s818 = scalar_lea.hbm %s6, %s817
          %s820 = sshll.u32 %s805, 4
          %s821 = int_to_ptr.vmem [resolvable:$true] %s820
          %823 = dma.vmem_to_hbm [thread:$0]  %s821, 128, %s818, %s802
        $region68: #{tpu_custom_call.1} parent=43 // pred_fallthru
          _
        // Predicated region
        $region69: #{tpu_custom_call.1} parent=43 // pred_check
          %p824 = pneg %p217
        $region70: #{tpu_custom_call.1} parent=43 // pred_check_branch
          %826 = sbr.rel (%p824) target = $region72
        $region71: #{tpu_custom_call.1} parent=43 // pred_region
          %s828 = ssub.s32 128, 128
          %829 = vsyncadd %s807, %s828
          %s830 = smul.addr %s32, 128
          %s831 = scalar_lea.hbm %s7, %s830
          %s833 = sshll.u32 %s810, 4
          %s834 = int_to_ptr.vmem [resolvable:$true] %s833
          %836 = dma.vmem_to_hbm [thread:$0]  %s834, 128, %s831, %s807
        $region72: #{tpu_custom_call.1} parent=43 // pred_fallthru
          _
      $region44: #{tpu_custom_call.1} parent=5 // pred_fallthru
        _
      %p837 = scmp.le.s32.totalorder 2, %s27
      // Predicated region
      $region73: #{tpu_custom_call.1} parent=5 // pred_check
        %p838 = pneg %p837
      $region74: #{tpu_custom_call.1} parent=5 // pred_check_branch
        %840 = sbr.rel (%p838) target = $region76
      $region75: #{tpu_custom_call.1} parent=5 // pred_region
        %s841 = ssub.s32 %s27, 2
        // Predicated region
        $region77: #{tpu_custom_call.1} parent=75 // pred_check
          %p842 = pneg %p197
        $region78: #{tpu_custom_call.1} parent=75 // pred_check_branch
          %844 = sbr.rel (%p842) target = $region80
        $region79: #{tpu_custom_call.1} parent=75 // pred_region
          %s845 = sand.u32 %s182, 1
          %s846 = scalar_lea.sflag [#allocation4], %s845
          %s847 = sand.u32 %s182, 1
          %s848 = smul.addr %s847, 8
          %s849 = scalar_lea.vmem [#allocation11], %s848
          %850 = dma.done %s846, 128
        $region80: #{tpu_custom_call.1} parent=75 // pred_fallthru
          _
        // Predicated region
        $region81: #{tpu_custom_call.1} parent=75 // pred_check
          %p851 = pneg %p223
        $region82: #{tpu_custom_call.1} parent=75 // pred_check_branch
          %853 = sbr.rel (%p851) target = $region84
        $region83: #{tpu_custom_call.1} parent=75 // pred_region
          %s854 = sand.u32 %s208, 1
          %s855 = scalar_lea.sflag [#allocation13], %s854
          %s856 = sand.u32 %s208, 1
          %s857 = smul.addr %s856, 8
          %s858 = scalar_lea.vmem [#allocation12], %s857
          %859 = dma.done %s855, 128
        $region84: #{tpu_custom_call.1} parent=75 // pred_fallthru
          _
      $region76: #{tpu_custom_call.1} parent=5 // pred_fallthru
        _
    $region6: #{tpu_custom_call.1} parent=1 // loop_footer
      %s31 = sadd.s32 1, %s27
    $region7: #{tpu_custom_call.1} parent=1 // loop_footer_branch
      %26 = sbr.rel target = $region3
    $region8: #{tpu_custom_call.1} parent=1 // loop_exit
      _
    %860 = vsyncpa [#allocation3], 1
    %s861 = scalar_lea.sflag [#allocation3], 1
    %862 = vsyncpa %s861, 1
    %863 = vsyncpa [#allocation6], 1
    %s864 = scalar_lea.sflag [#allocation6], 1
    %865 = vsyncpa %s864, 1
    %866 = vsyncpa [#allocation9], 1
    %867 = vsyncpa [#allocation4], 1
    %s868 = scalar_lea.sflag [#allocation4], 1
    %869 = vsyncpa %s868, 1
    %870 = vsyncpa [#allocation13], 1
    %s871 = scalar_lea.sflag [#allocation13], 1
    %872 = vsyncpa %s871, 1

</llo_original>
